<compile_context>
chip_gen: v5e
topology: v5e:2x2
jax: 0.10.0
libtpu: 0.0.40
codegen_flags: <defaults>
</compile_context>

<pallas_src>
import functools

import jax
import jax.numpy as jnp
from jax.experimental import pallas as pl
from jax.experimental.pallas import tpu as pltpu

_EPS = 1e-12
_LANE = 128
_MAX_TM = 2048       # rows per tile (multiple of 8); 2048*128*4B = 1 MiB per f32 input block
_CHUNK_ROWS = 256    # sub-chunk rows for in-tile accumulation (keeps live temporaries small)


def _static_pow(x, p):
    """x**p with trace-time-constant p; small integer exponents become VPU multiplies."""
    pf = float(p)
    if pf.is_integer() and 0 <= int(pf) <= 16:
        n = int(pf)
        if n == 0:
            return jnp.ones_like(x)
        result = None
        base = x
        while n:
            if n & 1:
                result = base if result is None else result * base
            n >>= 1
            if n:
                base = base * base
        return result
    return jnp.power(x, p)   # non-integer exponent: keep EUP path


def _gfl_kernel(x_ref, t_ref, out_ref, *, gamma, beta, tm, bpp,
                n_full_row_blocks, tail_rows, chunk_rows):
    p = pl.program_id(0)
    i = pl.program_id(1)
    blk = p * bpp + i        # un-clamped global block index of this tile

    # Zero this parallel slice's resident accumulator block on its first step.
    @pl.when(i == 0)
    def _():
        out_ref[...] = jnp.zeros_like(out_ref)

    def chunk_partials(r0, cr):
        """Loss partials of rows [r0, r0+cr), each folded to one (8, 128) vreg."""
        x = x_ref[pl.ds(r0, cr), :].astype(jnp.float32)
        t = t_ref[pl.ds(r0, cr), :].astype(jnp.float32)
        omx = 1.0 - x
        omt = 1.0 - t
        is_pos = t == 1.0
        is_neg = t < 1.0
        # One log per element: pos / neg masks are mutually exclusive, so the
        # discarded branch of the select never contributes.
        lg = jnp.log(jnp.where(is_pos, x, omx) + _EPS)
        npos = jnp.where(is_pos, 1.0, 0.0)
        pos = jnp.where(is_pos, lg * _static_pow(omx, gamma), 0.0)
        neg = jnp.where(is_neg,
                        lg * _static_pow(x, gamma) * _static_pow(omt, beta),
                        0.0)

        def fold(v):   # (cr, 128) -> (8, 128) with pure VPU adds (no XLU)
            return v.reshape(cr // 8, 8, _LANE).sum(axis=0)

        return fold(npos), fold(pos), fold(neg)

    def process_rows(n_rows):
        """Accumulate the contribution of rows [0, n_rows) of this tile."""
        num_chunks = n_rows // chunk_rows
        rem_rows = n_rows - num_chunks * chunk_rows
        zero = jnp.zeros((8, _LANE), jnp.float32)
        acc = (zero, zero, zero)
        if num_chunks > 0:
            def body(c, carry):
                a0, a1, a2 = carry
                r0 = pl.multiple_of(c * chunk_rows, chunk_rows)
                p0, p1, p2 = chunk_partials(r0, chunk_rows)
                return (a0 + p0, a1 + p1, a2 + p2)
            acc = jax.lax.fori_loop(0, num_chunks, body, acc, unroll=True)
        if rem_rows:
            p0, p1, p2 = chunk_partials(num_chunks * chunk_rows, rem_rows)
            acc = (acc[0] + p0, acc[1] + p1, acc[2] + p2)
        out_ref[0, 0, :, :] += acc[0]
        out_ref[0, 1, :, :] += acc[1]
        out_ref[0, 2, :, :] += acc[2]

    # Fast path: fully-populated interior tile (no masking at all).
    @pl.when(blk < n_full_row_blocks)
    def _():
        process_rows(tm)

    # Tail path: the single partial last tile; row count is a trace-time
    # constant, so still no per-element masking.  Clamped duplicate blocks
    # from the parallel ceiling-divide (blk > n_full_row_blocks) fall through
    # both branches and are skipped entirely.
    if tail_rows:
        @pl.when(blk == n_full_row_blocks)
        def _():
            process_rows(tail_rows)


def _num_parallel_slices(total_blocks):
    """2-way parallel grid axis only on chips with 2 TensorCores; 1 elsewhere."""
    if total_blocks < 2:
        return 1
    try:
        kind = jax.devices()[0].device_kind.lower()
    except Exception:
        return 1
    if ("v7" in kind) or ("v4" in kind) or ("v5p" in kind):
        return 2
    return 1


def gaussian_focal_loss(inp, tgt, *, loss_weight=1.0, gamma=2.0, beta=4.0, alpha=-1.0):
    assert inp.shape == tgt.shape
    n = int(inp.size)

    flat_x = inp.reshape(-1)
    flat_t = tgt.reshape(-1)

    tile_elems = 8 * _LANE                 # one (8,128) vreg worth of elements
    n_main = (n // tile_elems) * tile_elems
    rem = n - n_main

    npos = jnp.float32(0.0)
    pos_sum = jnp.float32(0.0)
    neg_sum = jnp.float32(0.0)

    if n_main:
        x_main = flat_x if rem == 0 else flat_x[:n_main]
        t_main = flat_t if rem == 0 else flat_t[:n_main]

        rows = n_main // _LANE             # multiple of 8 by construction
        x2 = x_main.reshape(rows, _LANE)
        t2 = t_main.reshape(rows, _LANE)

        tm = min(_MAX_TM, rows)            # multiple of 8, <= rows
        n_full_row_blocks = rows // tm     # >= 1
        tail_rows = rows - n_full_row_blocks * tm        # multiple of 8, < tm
        total_blocks = n_full_row_blocks + (1 if tail_rows else 0)

        num_parallel = _num_parallel_slices(total_blocks)
        bpp = (total_blocks + num_parallel - 1) // num_parallel

        def in_map(p, i):
            # Clamp so the DMA stays in bounds; overrun/duplicate blocks are
            # skipped in-kernel via the un-clamped block index.
            return (jnp.minimum(p * bpp + i, total_blocks - 1), 0)

        kernel = functools.partial(
            _gfl_kernel, gamma=gamma, beta=beta, tm=tm, bpp=bpp,
            n_full_row_blocks=n_full_row_blocks, tail_rows=tail_rows,
            chunk_rows=_CHUNK_ROWS)

        out = pl.pallas_call(
            kernel,
            out_shape=jax.ShapeDtypeStruct((num_parallel, 3, 8, _LANE), jnp.float32),
            grid_spec=pltpu.PrefetchScalarGridSpec(
                num_scalar_prefetch=0,
                grid=(num_parallel, bpp),
                in_specs=[
                    pl.BlockSpec((tm, _LANE), in_map),
                    pl.BlockSpec((tm, _LANE), in_map),
                ],
                out_specs=pl.BlockSpec((1, 3, 8, _LANE), lambda p, i: (p, 0, 0, 0)),
            ),
            compiler_params=pltpu.CompilerParams(
                dimension_semantics=("parallel", "arbitrary"),
                vmem_limit_bytes=32 * 1024 * 1024),
        )(x2, t2)

        # Single tiny reduction of the (P, 3, 8, 128) partials -> 3 scalars.
        sums = out.sum(axis=(0, 2, 3))
        npos = npos + sums[0]
        pos_sum = pos_sum + sums[1]
        neg_sum = neg_sum + sums[2]

    if rem:
        # <1024-element remainder handled in plain JAX (negligible work;
        # avoids any full-array pad copy before the memory-bound kernel).
        xt = flat_x[n_main:].astype(jnp.float32)
        tt = flat_t[n_main:].astype(jnp.float32)
        pos_m = tt == 1.0
        neg_m = tt < 1.0
        npos = npos + jnp.sum(jnp.where(pos_m, 1.0, 0.0))
        pos_sum = pos_sum + jnp.sum(
            jnp.where(pos_m, jnp.log(xt + _EPS) * jnp.power(1.0 - xt, gamma), 0.0))
        neg_sum = neg_sum + jnp.sum(
            jnp.where(neg_m,
                      jnp.log(1.0 - xt + _EPS) * jnp.power(xt, gamma)
                      * jnp.power(1.0 - tt, beta),
                      0.0))

    if alpha >= 0:
        pos_sum = alpha * pos_sum
        neg_sum = (1.0 - alpha) * neg_sum

    safe_npos = jnp.where(npos == 0, 1.0, npos)
    loss = jnp.where(npos == 0, -neg_sum, -(pos_sum + neg_sum) / safe_npos)
    # loss is already a scalar, so .mean() is the identity.
    return loss * loss_weight


def _reference(inp, tgt, *, loss_weight=1.0, gamma=2.0, beta=4.0, alpha=-1.0):
    x = inp.astype(jnp.float32)
    t = tgt.astype(jnp.float32)
    pos_inds = (t == 1.0).astype(jnp.float32)
    neg_inds = (t < 1.0).astype(jnp.float32)
    num_pos = pos_inds.sum()
    neg_w = jnp.power(1.0 - t, beta)
    pos_loss = (jnp.log(x + _EPS) * jnp.power(1.0 - x, gamma) * pos_inds).sum()
    neg_loss = (jnp.log(1.0 - x + _EPS) * jnp.power(x, gamma) * neg_w * neg_inds).sum()
    if alpha >= 0:
        pos_loss = alpha * pos_loss
        neg_loss = (1.0 - alpha) * neg_loss
    safe = jnp.where(num_pos == 0, 1.0, num_pos)
    loss = jnp.where(num_pos == 0, -neg_loss, -(pos_loss + neg_loss) / safe)
    return loss * loss_weight


if __name__ == "__main__":
    key = jax.random.PRNGKey(0)
    k1, k2, k3, k4, k5 = jax.random.split(key, 5)

    # Test 1: standard heatmap shape (1024-aligned), with some exact-1.0 positives.
    N, C, H, W = 2, 4, 16, 16
    inp = jax.nn.sigmoid(jax.random.normal(k1, (N, C, H, W), dtype=jnp.float32))
    tgt = jax.random.uniform(k2, (N, C, H, W), dtype=jnp.float32, minval=0.0, maxval=0.99)
    pos_mask = jax.random.uniform(k3, (N, C, H, W)) > 0.98
    tgt = jnp.where(pos_mask, 1.0, tgt)

    out = gaussian_focal_loss(inp, tgt, loss_weight=1.0, gamma=2.0, beta=4.0, alpha=-1.0)
    out = jax.block_until_ready(out)
    ref = _reference(inp, tgt, loss_weight=1.0, gamma=2.0, beta=4.0, alpha=-1.0)
    assert jnp.allclose(out, ref, rtol=1e-5, atol=1e-5), (out, ref)

    # Test 2: odd size (not a multiple of 1024), no positives, alpha >= 0
    # (exercises the plain-JAX tail path and the num_pos == 0 branch).
    shape2 = (3, 5, 7, 11)
    inp2 = jax.nn.sigmoid(jax.random.normal(k4, shape2, dtype=jnp.float32))
    tgt2 = jax.random.uniform(k5, shape2, dtype=jnp.float32, minval=0.0, maxval=0.99)

    out2 = gaussian_focal_loss(inp2, tgt2, loss_weight=0.5, gamma=2.0, beta=4.0, alpha=0.25)
    out2 = jax.block_until_ready(out2)
    ref2 = _reference(inp2, tgt2, loss_weight=0.5, gamma=2.0, beta=4.0, alpha=0.25)
    assert jnp.allclose(out2, ref2, rtol=1e-5, atol=1e-5), (out2, ref2)

    print("KERNEL_OK")
</pallas_src>

<mosaic_0001>
module attributes {stable_mosaic.version = 11 : i64} {
  func.func @_gfl_kernel(%arg0: i32, %arg1: i32, %arg2: memref<16x128xf32, #tpu.memory_space<vmem>>, %arg3: memref<16x128xf32, #tpu.memory_space<vmem>>, %arg4: memref<1x3x8x128xf32, #tpu.memory_space<vmem>>) attributes {dimension_semantics = [#tpu.dimension_semantics<parallel>, #tpu.dimension_semantics<arbitrary>], iteration_bounds = array<i64: 1, 1>, scalar_prefetch = 0 : i64, scratch_operands = 0 : i64, tpu.core_type = #tpu.core_type<tc>, window_params = [{transform_indices = @transform_0, window_bounds = array<i64: 16, 128>}, {transform_indices = @transform_1, window_bounds = array<i64: 16, 128>}, {transform_indices = @transform_2, window_bounds = array<i64: 1, 3, 8, 128>}]} {
    %c1_i32 = arith.constant 1 : i32
    %0 = arith.muli %arg0, %c1_i32 : i32
    %1 = arith.addi %0, %arg1 : i32
    %c0_i32 = arith.constant 0 : i32
    %2 = arith.cmpi eq, %arg1, %c0_i32 : i32
    %3 = arith.extui %2 : i1 to i32
    %c0_i32_0 = arith.constant 0 : i32
    %4 = arith.cmpi ne, %3, %c0_i32_0 : i32
    scf.if %4 {
      %cst = arith.constant 0.000000e+00 : f32
      %8 = vector.broadcast %cst : f32 to vector<1x3x8x128xf32>
      %c0 = arith.constant 0 : index
      %c0_3 = arith.constant 0 : index
      %c0_4 = arith.constant 0 : index
      %c0_5 = arith.constant 0 : index
      %9 = vector.load %arg4[%c0, %c0_3, %c0_4, %c0_5] : memref<1x3x8x128xf32, #tpu.memory_space<vmem>>, vector<1x3x8x128xf32>
      tpu.vector_store %arg4[%c0, %c0_3, %c0_4, %c0_5], %8 {strides = array<i32>} : memref<1x3x8x128xf32, #tpu.memory_space<vmem>>, vector<1x3x8x128xf32>,
    } else {
    }
    %c1_i32_1 = arith.constant 1 : i32
    %5 = arith.cmpi slt, %1, %c1_i32_1 : i32
    %6 = arith.extui %5 : i1 to i32
    %c0_i32_2 = arith.constant 0 : i32
    %7 = arith.cmpi ne, %6, %c0_i32_2 : i32
    scf.if %7 {
      %cst = arith.constant 0.000000e+00 : f32
      %8 = vector.broadcast %cst : f32 to vector<8x128xf32>
      %c0 = arith.constant 0 : index
      %c0_3 = arith.constant 0 : index
      %9 = vector.load %arg2[%c0, %c0_3] : memref<16x128xf32, #tpu.memory_space<vmem>>, vector<16x128xf32>
      %c0_4 = arith.constant 0 : index
      %c0_5 = arith.constant 0 : index
      %10 = vector.load %arg3[%c0_4, %c0_5] : memref<16x128xf32, #tpu.memory_space<vmem>>, vector<16x128xf32>
      %cst_6 = arith.constant 1.000000e+00 : f32
      %11 = vector.broadcast %cst_6 : f32 to vector<16x128xf32>
      %12 = arith.subf %11, %9 : vector<16x128xf32>
      %cst_7 = arith.constant 1.000000e+00 : f32
      %13 = vector.broadcast %cst_7 : f32 to vector<16x128xf32>
      %14 = arith.subf %13, %10 : vector<16x128xf32>
      %cst_8 = arith.constant 1.000000e+00 : f32
      %15 = vector.broadcast %cst_8 : f32 to vector<16x128xf32>
      %16 = arith.cmpf oeq, %10, %15 : vector<16x128xf32>
      %cst_9 = arith.constant 1.000000e+00 : f32
      %17 = vector.broadcast %cst_9 : f32 to vector<16x128xf32>
      %18 = arith.cmpf olt, %10, %17 : vector<16x128xf32>
      %19 = arith.select %16, %9, %12 : vector<16x128xi1>, vector<16x128xf32>
      %cst_10 = arith.constant 9.99999996E-13 : f32
      %20 = vector.broadcast %cst_10 : f32 to vector<16x128xf32>
      %21 = arith.addf %19, %20 : vector<16x128xf32>
      %22 = math.log %21 : vector<16x128xf32>
      %cst_11 = arith.constant 1.000000e+00 : f32
      %cst_12 = arith.constant 0.000000e+00 : f32
      %23 = vector.broadcast %cst_11 : f32 to vector<16x128xf32>
      %24 = vector.broadcast %cst_12 : f32 to vector<16x128xf32>
      %25 = arith.select %16, %23, %24 : vector<16x128xi1>, vector<16x128xf32>
      %26 = arith.mulf %12, %12 : vector<16x128xf32>
      %27 = arith.mulf %22, %26 : vector<16x128xf32>
      %cst_13 = arith.constant 0.000000e+00 : f32
      %28 = vector.broadcast %cst_13 : f32 to vector<16x128xf32>
      %29 = arith.select %16, %27, %28 : vector<16x128xi1>, vector<16x128xf32>
      %30 = arith.mulf %9, %9 : vector<16x128xf32>
      %31 = arith.mulf %22, %30 : vector<16x128xf32>
      %32 = arith.mulf %14, %14 : vector<16x128xf32>
      %33 = arith.mulf %32, %32 : vector<16x128xf32>
      %34 = arith.mulf %31, %33 : vector<16x128xf32>
      %cst_14 = arith.constant 0.000000e+00 : f32
      %35 = vector.broadcast %cst_14 : f32 to vector<16x128xf32>
      %36 = arith.select %18, %34, %35 : vector<16x128xi1>, vector<16x128xf32>
      %37 = vector.shape_cast %25 : vector<16x128xf32> to vector<2x8x128xf32>
      %cst_15 = arith.constant dense<0.000000e+00> : vector<8x128xf32>
      %38 = vector.multi_reduction <add>, %37, %cst_15 [0] : vector<2x8x128xf32> to vector<8x128xf32>
      %39 = vector.shape_cast %29 : vector<16x128xf32> to vector<2x8x128xf32>
      %cst_16 = arith.constant dense<0.000000e+00> : vector<8x128xf32>
      %40 = vector.multi_reduction <add>, %39, %cst_16 [0] : vector<2x8x128xf32> to vector<8x128xf32>
      %41 = vector.shape_cast %36 : vector<16x128xf32> to vector<2x8x128xf32>
      %cst_17 = arith.constant dense<0.000000e+00> : vector<8x128xf32>
      %42 = vector.multi_reduction <add>, %41, %cst_17 [0] : vector<2x8x128xf32> to vector<8x128xf32>
      %43 = arith.addf %8, %38 : vector<8x128xf32>
      %44 = arith.addf %8, %40 : vector<8x128xf32>
      %45 = arith.addf %8, %42 : vector<8x128xf32>
      %c0_18 = arith.constant 0 : index
      %c0_19 = arith.constant 0 : index
      %c0_20 = arith.constant 0 : index
      %c0_21 = arith.constant 0 : index
      %46 = vector.load %arg4[%c0_18, %c0_19, %c0_20, %c0_21] : memref<1x3x8x128xf32, #tpu.memory_space<vmem>>, vector<1x1x8x128xf32>
      %47 = vector.shape_cast %46 : vector<1x1x8x128xf32> to vector<8x128xf32>
      %48 = arith.addf %47, %43 : vector<8x128xf32>
      %c0_22 = arith.constant 0 : index
      %c0_23 = arith.constant 0 : index
      %c0_24 = arith.constant 0 : index
      %c0_25 = arith.constant 0 : index
      %49 = vector.load %arg4[%c0_22, %c0_23, %c0_24, %c0_25] : memref<1x3x8x128xf32, #tpu.memory_space<vmem>>, vector<1x1x8x128xf32>
      %50 = vector.shape_cast %49 : vector<1x1x8x128xf32> to vector<8x128xf32>
      %51 = vector.shape_cast %48 : vector<8x128xf32> to vector<1x1x8x128xf32>
      tpu.vector_store %arg4[%c0_22, %c0_23, %c0_24, %c0_25], %51 {strides = array<i32>} : memref<1x3x8x128xf32, #tpu.memory_space<vmem>>, vector<1x1x8x128xf32>,
      %c0_26 = arith.constant 0 : index
      %c1 = arith.constant 1 : index
      %c0_27 = arith.constant 0 : index
      %c0_28 = arith.constant 0 : index
      %52 = vector.load %arg4[%c0_26, %c1, %c0_27, %c0_28] : memref<1x3x8x128xf32, #tpu.memory_space<vmem>>, vector<1x1x8x128xf32>
      %53 = vector.shape_cast %52 : vector<1x1x8x128xf32> to vector<8x128xf32>
      %54 = arith.addf %53, %44 : vector<8x128xf32>
      %c0_29 = arith.constant 0 : index
      %c1_30 = arith.constant 1 : index
      %c0_31 = arith.constant 0 : index
      %c0_32 = arith.constant 0 : index
      %55 = vector.load %arg4[%c0_29, %c1_30, %c0_31, %c0_32] : memref<1x3x8x128xf32, #tpu.memory_space<vmem>>, vector<1x1x8x128xf32>
      %56 = vector.shape_cast %55 : vector<1x1x8x128xf32> to vector<8x128xf32>
      %57 = vector.shape_cast %54 : vector<8x128xf32> to vector<1x1x8x128xf32>
      tpu.vector_store %arg4[%c0_29, %c1_30, %c0_31, %c0_32], %57 {strides = array<i32>} : memref<1x3x8x128xf32, #tpu.memory_space<vmem>>, vector<1x1x8x128xf32>,
      %c0_33 = arith.constant 0 : index
      %c2 = arith.constant 2 : index
      %c0_34 = arith.constant 0 : index
      %c0_35 = arith.constant 0 : index
      %58 = vector.load %arg4[%c0_33, %c2, %c0_34, %c0_35] : memref<1x3x8x128xf32, #tpu.memory_space<vmem>>, vector<1x1x8x128xf32>
      %59 = vector.shape_cast %58 : vector<1x1x8x128xf32> to vector<8x128xf32>
      %60 = arith.addf %59, %45 : vector<8x128xf32>
      %c0_36 = arith.constant 0 : index
      %c2_37 = arith.constant 2 : index
      %c0_38 = arith.constant 0 : index
      %c0_39 = arith.constant 0 : index
      %61 = vector.load %arg4[%c0_36, %c2_37, %c0_38, %c0_39] : memref<1x3x8x128xf32, #tpu.memory_space<vmem>>, vector<1x1x8x128xf32>
      %62 = vector.shape_cast %61 : vector<1x1x8x128xf32> to vector<8x128xf32>
      %63 = vector.shape_cast %60 : vector<8x128xf32> to vector<1x1x8x128xf32>
      tpu.vector_store %arg4[%c0_36, %c2_37, %c0_38, %c0_39], %63 {strides = array<i32>} : memref<1x3x8x128xf32, #tpu.memory_space<vmem>>, vector<1x1x8x128xf32>,
    } else {
    }
    return
  }
  func.func @transform_0(%arg0: i32, %arg1: i32) -> (i32, i32) {
    %c1_i32 = arith.constant 1 : i32
    %0 = arith.muli %arg0, %c1_i32 : i32
    %1 = arith.addi %0, %arg1 : i32
    %c0_i32 = arith.constant 0 : i32
    %2 = arith.minsi %1, %c0_i32 : i32
    %c0_i32_0 = arith.constant 0 : i32
    %c0_i32_1 = arith.constant 0 : i32
    return %2, %c0_i32_0 : i32, i32
  }
  func.func @transform_1(%arg0: i32, %arg1: i32) -> (i32, i32) {
    %c1_i32 = arith.constant 1 : i32
    %0 = arith.muli %arg0, %c1_i32 : i32
    %1 = arith.addi %0, %arg1 : i32
    %c0_i32 = arith.constant 0 : i32
    %2 = arith.minsi %1, %c0_i32 : i32
    %c0_i32_0 = arith.constant 0 : i32
    %c0_i32_1 = arith.constant 0 : i32
    return %2, %c0_i32_0 : i32, i32
  }
  func.func @transform_2(%arg0: i32, %arg1: i32) -> (i32, i32, i32, i32) {
    %c0_i32 = arith.constant 0 : i32
    %c0_i32_0 = arith.constant 0 : i32
    %c0_i32_1 = arith.constant 0 : i32
    %c0_i32_2 = arith.constant 0 : i32
    return %arg0, %c0_i32, %c0_i32_0, %c0_i32_1 : i32, i32, i32, i32
  }
}

</mosaic_0001>

<llo_original>
// kernel: tpu_custom_call.1
$region0: #{tpu_custom_call.1}
  #allocation0 [shape = 'u32[]', space=smem, size = 0x4, offset = 0x4, fixed_abs, tag = 'smem constant byte address 0x4 - core index']
  #allocation1 [shape = 'u32[72,128]{1,0:T(1,128)}', space=vmem, size = 0x9000, scoped, tag = 'internal scratch']
  %s0 = inlined_call_operand.hbm [shape: f32[16,128], index: 0, kind: input, shape index: {}]
  %s1 = inlined_call_operand.hbm [shape: f32[16,128], index: 1, kind: input, shape index: {}]
  %s2 = inlined_call_operand.hbm [shape: f32[1,3,8,128], index: 2, kind: output, shape index: {}]
  %s3 = sld [smem:[#allocation0]]
  $region34: #{tpu_custom_call.1} parent=0
    _
  %s5 = ssub.s32 1, %s3
  %s6 = scalar_select 0, %s5, %s3
  $region1: #{tpu_custom_call.1} parent=0
    #allocation2 [shape = 'u8[8192]{0}', space=vmem, size = 0x2000, scoped, tag = 'input window, operand 0, single buffered']
    #allocation3 [shape = 's32[1]{0}', space=sflag, size = 0x4, scoped, tag = 'scoped memory for tpu_custom_call.1']
    #allocation4 [shape = 's32[1]{0}', space=sflag, size = 0x4, scoped, tag = 'scoped memory for tpu_custom_call.1']
    #allocation5 [shape = 'u8[8192]{0}', space=vmem, size = 0x2000, scoped, tag = 'input window, operand 1, single buffered']
    #allocation6 [shape = 's32[1]{0}', space=sflag, size = 0x4, scoped, tag = 'scoped memory for tpu_custom_call.1']
    #allocation7 [shape = 'u8[12288]{0}', space=vmem, size = 0x3000, scoped, tag = 'output window, operand 0, single buffered']
    %7 = vsyncpa [#allocation3], 0
    %8 = vsyncpa [#allocation6], 0
    %9 = vsyncpa [#allocation4], 0
    // Predicated region
    $region2: #{tpu_custom_call.1} parent=1 // pred_check
      _
    $region3: #{tpu_custom_call.1} parent=1 // pred_check_branch
      %11 = sbr.rel (0) target = $region5
    $region4: #{tpu_custom_call.1} parent=1 // pred_region
      %s12 = sadd.s32 0, 0
      %p13 = scmp.lt.s32.totalorder %s12, 0
      %s14 = scalar_select %p13, %s12, 0
      %s15 = smul.u32 2, %s14
      %17 = vsyncadd [#allocation3], 0
      %s18 = smul.addr %s15, 8
      %s19 = scalar_lea.hbm %s0, %s18
      %s20 = sshll.u32 %s19, 4
      %s21 = int_to_ptr.hbm [resolvable:$true] %s20
      %s22 = sshll.u32 [#allocation2], 4
      %s23 = int_to_ptr.vmem [resolvable:$true] %s22
      %28 = dma.hbm_to_vmem [thread:$0]  %s21, 256, %s23, [#allocation3], 128, 128, 8
    $region5: #{tpu_custom_call.1} parent=1 // pred_fallthru
      _
    // Predicated region
    $region6: #{tpu_custom_call.1} parent=1 // pred_check
      _
    $region7: #{tpu_custom_call.1} parent=1 // pred_check_branch
      %30 = sbr.rel (0) target = $region9
    $region8: #{tpu_custom_call.1} parent=1 // pred_region
      %s31 = sadd.s32 0, 0
      %p32 = scmp.lt.s32.totalorder %s31, 0
      %s33 = scalar_select %p32, %s31, 0
      %s34 = smul.u32 2, %s33
      %36 = vsyncadd [#allocation6], 0
      %s37 = smul.addr %s34, 8
      %s38 = scalar_lea.hbm %s1, %s37
      %s39 = sshll.u32 %s38, 4
      %s40 = int_to_ptr.hbm [resolvable:$true] %s39
      %s41 = sshll.u32 [#allocation5], 4
      %s42 = int_to_ptr.vmem [resolvable:$true] %s41
      %47 = dma.hbm_to_vmem [thread:$0]  %s40, 256, %s42, [#allocation6], 128, 128, 8
    $region9: #{tpu_custom_call.1} parent=1 // pred_fallthru
      _
    // Predicated region
    $region10: #{tpu_custom_call.1} parent=1 // pred_check
      _
    $region11: #{tpu_custom_call.1} parent=1 // pred_check_branch
      %49 = sbr.rel (0) target = $region13
    $region12: #{tpu_custom_call.1} parent=1 // pred_region
      %51 = dma.done [#allocation3], 256
    $region13: #{tpu_custom_call.1} parent=1 // pred_fallthru
      _
    // Predicated region
    $region14: #{tpu_custom_call.1} parent=1 // pred_check
      _
    $region15: #{tpu_custom_call.1} parent=1 // pred_check_branch
      %53 = sbr.rel (0) target = $region17
    $region16: #{tpu_custom_call.1} parent=1 // pred_region
      %55 = dma.done [#allocation6], 256
    $region17: #{tpu_custom_call.1} parent=1 // pred_fallthru
      _
    %s56 = sadd.s32 0, 0
    %p57 = scmp.lt.s32.totalorder %s56, 0
    %s58 = scalar_select %p57, %s56, 0
    %s59 = smul.u32 2, %s58
    %s60 = sadd.s32 0, 0
    %p61 = scmp.lt.s32.totalorder %s60, 0
    %s62 = scalar_select %p61, %s60, 0
    %s63 = smul.u32 2, %s62
    %s64 = sadd.s32 0, 0
    %p65 = scmp.eq.s32.totalorder 0, 0
    // Predicated region
    $region18: #{tpu_custom_call.1} parent=1 // pred_check
      %p66 = pneg %p65
    $region19: #{tpu_custom_call.1} parent=1 // pred_check_branch
      %68 = sbr.rel (%p66) target = $region21
    $region20: #{tpu_custom_call.1} parent=1 // pred_region
      %69 = vst [vmem:[#allocation7] sm:$0xff] 0.0
      %70 = vst [vmem:[#allocation7 + $0x8] sm:$0xff] 0.0
      %71 = vst [vmem:[#allocation7 + $0x10] sm:$0xff] 0.0
    $region21: #{tpu_custom_call.1} parent=1 // pred_fallthru
      _
    %p72 = scmp.lt.s32.totalorder %s64, 1
    // Predicated region
    $region22: #{tpu_custom_call.1} parent=1 // pred_check
      %p73 = pneg %p72
    $region23: #{tpu_custom_call.1} parent=1 // pred_check_branch
      %75 = sbr.rel (%p73) target = $region25
    $region24: #{tpu_custom_call.1} parent=1 // pred_region
      %v76 = vld [vmem:[#allocation2] sm:$0xff]
      %v77 = vld [vmem:[#allocation2 + $0x8] sm:$0xff]
      %v78 = vld [vmem:[#allocation5] sm:$0xff]
      %v79 = vld [vmem:[#allocation5 + $0x8] sm:$0xff]
      %v80 = vsub.f32 1.0, %v76
      %v81 = vsub.f32 1.0, %v77
      %v82 = vsub.f32 1.0, %v78
      %v83 = vsub.f32 1.0, %v79
      %vm84 = vcmp.eq.f32.partialorder %v78, 1.0
      %vm85 = vcmp.eq.f32.partialorder %v79, 1.0
      %vm86 = vcmp.lt.f32.partialorder %v78, 1.0
      %vm87 = vcmp.lt.f32.partialorder %v79, 1.0
      %v88 = vsel %vm84, %v76, %v80
      %v89 = vsel %vm85, %v77, %v81
      %v90 = vadd.f32 %v88, 1e-12
      %v91 = vadd.f32 %v89, 1e-12
      %v92 = vlog2.pop %v90
      %v93 = vmul.f32 %v92, 0.6931472
      %v94 = vlog2.pop %v91
      %v95 = vmul.f32 %v94, 0.6931472
      %v96 = vsel %vm84, 1.0, 0.0
      %v97 = vsel %vm85, 1.0, 0.0
      %v98 = vmul.f32 %v80, %v80
      %v99 = vmul.f32 %v81, %v81
      %v100 = vmul.f32 %v93, %v98
      %v101 = vmul.f32 %v95, %v99
      %v102 = vsel %vm84, %v100, 0.0
      %v103 = vsel %vm85, %v101, 0.0
      %v104 = vmul.f32 %v76, %v76
      %v105 = vmul.f32 %v77, %v77
      %v106 = vmul.f32 %v93, %v104
      %v107 = vmul.f32 %v95, %v105
      %v108 = vmul.f32 %v82, %v82
      %v109 = vmul.f32 %v83, %v83
      %v110 = vmul.f32 %v108, %v108
      %v111 = vmul.f32 %v109, %v109
      %v112 = vmul.f32 %v106, %v110
      %v113 = vmul.f32 %v107, %v111
      %v114 = vsel %vm86, %v112, 0.0
      %v115 = vsel %vm87, %v113, 0.0
      %v116 = vadd.f32 %v96, %v97
      %v117 = vadd.f32 %v102, %v103
      %v118 = vadd.f32 %v114, %v115
      %v119 = vadd.f32 %v116, 0.0
      %v120 = vadd.f32 %v117, 0.0
      %v121 = vadd.f32 %v118, 0.0
      %v122 = vld [vmem:[#allocation7] sm:$0xff]
      %v123 = vadd.f32 %v122, %v119
      %124 = vst [vmem:[#allocation7] sm:$0xff] %v123
      %s125 = scalar_lea.vmem [#allocation7], 8
      %v126 = vld [vmem:[%s125] sm:$0xff]
      %v127 = vadd.f32 %v126, %v120
      %128 = vst [vmem:[%s125] sm:$0xff] %v127
      %s129 = scalar_lea.vmem [#allocation7], 16
      %v130 = vld [vmem:[%s129] sm:$0xff]
      %v131 = vadd.f32 %v130, %v121
      %132 = vst [vmem:[%s129] sm:$0xff] %v131
    $region25: #{tpu_custom_call.1} parent=1 // pred_fallthru
      _
    // Predicated region
    $region26: #{tpu_custom_call.1} parent=1 // pred_check
      _
    $region27: #{tpu_custom_call.1} parent=1 // pred_check_branch
      %134 = sbr.rel (0) target = $region29
    $region28: #{tpu_custom_call.1} parent=1 // pred_region
      %136 = vsyncadd [#allocation4], 0
      %s137 = sshll.u32 [#allocation7], 4
      %s138 = int_to_ptr.vmem [resolvable:$true] %s137
      %s139 = sshll.u32 %s2, 4
      %s140 = int_to_ptr.hbm [resolvable:$true] %s139
      %145 = dma.vmem_to_hbm [thread:$0]  %s138, 384, %s140, [#allocation4], 128, 128, 8
    $region29: #{tpu_custom_call.1} parent=1 // pred_fallthru
      _
    // Predicated region
    $region30: #{tpu_custom_call.1} parent=1 // pred_check
      _
    $region31: #{tpu_custom_call.1} parent=1 // pred_check_branch
      %147 = sbr.rel (0) target = $region33
    $region32: #{tpu_custom_call.1} parent=1 // pred_region
      %149 = dma.done [#allocation4], 384
    $region33: #{tpu_custom_call.1} parent=1 // pred_fallthru
      _
    %150 = vsyncpa [#allocation3], 1
    %151 = vsyncpa [#allocation6], 1
    %152 = vsyncpa [#allocation4], 1

</llo_original>
